<compile_context>
chip_gen: v6e
topology: v6e:2x2x1
jax: 0.10.0
libtpu: 0.0.40
codegen_flags: <defaults>
</compile_context>

<pallas_src>
import math
import jax
import jax.numpy as jnp
from jax import lax
from jax.experimental import pallas as pl
from jax.experimental.pallas import tpu as pltpu


def _make_projector_kernel(head, d, C, carry_kv, mxu_dtype):
    def projector_kernel(q_ref, tok_ref, wkv_ref, o_ref, *scratch):
        # q_ref  : (C, HW_t)    feature pixels for this (batch, hw-tile), channels-major
        # tok_ref: (CT+1, L)    tokens for this batch (ones row appended -> bias fold)
        # wkv_ref: (2C, CT+1)   [W_k*inv_scale | b_k*inv_scale ; W_v | b_v]
        # scratch: optional (2C, L) VMEM K/V carry (only when carry_kv=True)

        def project_kv():
            return jnp.dot(wkv_ref[...], tok_ref[...],
                           preferred_element_type=jnp.float32)

        if carry_kv:
            kv_ref, = scratch
            # Compute K/V once per batch element; resident across the HW-tile
            # axis (which must then be sequential / "arbitrary").
            @pl.when(pl.program_id(1) == 0)
            def _():
                kv_ref[...] = project_kv().astype(mxu_dtype)
            kv = kv_ref[...]                    # (2C, L) mxu_dtype
        else:
            # Tiny matmul: recompute every step so both grid axes can be
            # "parallel" (v7x megacore sharding of HW tiles at small N).
            kv = project_kv().astype(mxu_dtype)

        q_in = q_ref[...]                       # (C, HW_t) feature dtype (residual)
        q_mx = q_in.astype(mxu_dtype)           # bf16 MXU operand

        for hh in range(head):                  # small compile-time constant; unrolled
            r0, r1 = hh * d, (hh + 1) * d
            k_h = kv[r0:r1, :]                  # (d, L)   (softmax scale pre-folded)
            v_h = kv[C + r0:C + r1, :]          # (d, L)
            q_h = q_mx[r0:r1, :]                # (d, HW_t)

            # scores^T = K^T Q : contract on d, no explicit transpose needed.
            s = lax.dot_general(
                k_h, q_h,
                dimension_numbers=(((0,), (0,)), ((), ())),
                preferred_element_type=jnp.float32)                 # (L, HW_t) f32

            # softmax over tokens (axis 0); f32 epilogue, normalize late.
            s = s - jnp.max(s, axis=0, keepdims=True)
            p = jnp.exp(s)                                          # (L, HW_t) f32
            denom = jnp.sum(p, axis=0, keepdims=True)               # (1, HW_t) f32

            proj = jnp.dot(v_h, p.astype(mxu_dtype),
                           preferred_element_type=jnp.float32)      # (d, HW_t) f32
            proj = proj * pl.reciprocal(denom, approx=True)         # EUP slot

            # Per-head direct store: bounds the live f32 set to one head and
            # keeps the store lane-dense along HW (no concat / spills).
            o_ref[r0:r1, :] = (q_in[r0:r1, :].astype(jnp.float32) + proj
                               ).astype(o_ref.dtype)

    return projector_kernel


def _round_up(x, m):
    return ((x + m - 1) // m) * m


def _pick_hw_tile(HW, C, CT1, L, d, in_bytes, out_bytes, kv_bytes, vmem_budget):
    """Budget-aware HW tile: multiple of 128 (or the full extent), <= 2048."""
    if HW <= 256:
        return HW  # full-extent block is always legal

    L_lane = _round_up(L, 128)
    CT_lane = _round_up(CT1, 128)
    L_sub = _round_up(L, 8)

    # Tile-independent VMEM: K/V block (f32 before cast), token & weight blocks
    # (double-buffered, lane/sublane padded).
    fixed = (_round_up(2 * C, 8) * L_lane * max(kv_bytes, 4)
             + 2 * _round_up(CT1, 8) * L_lane * kv_bytes
             + 2 * _round_up(2 * C, 8) * CT_lane * kv_bytes)

    # Per-HW-element VMEM: q/out double buffers + in-kernel q copies + one
    # head's f32 score/prob and projection intermediates.
    per_hw = (C * (2 * in_bytes + 2 * out_bytes)
              + C * (in_bytes + kv_bytes)
              + (L_sub + 2 * d) * 4)

    avail = vmem_budget - fixed
    if avail <= per_hw * 128:
        t = 128
    else:
        t = max(128, min(2048, (avail // per_hw) // 128 * 128))

    if HW <= t:
        return HW
    # Prefer a tile that divides HW exactly (every store unmasked, no tail).
    for cand in range(t, 127, -128):
        if HW % cand == 0:
            return cand
    return t  # tail handled by cdiv grid + masked edge block


def projector_forward(feature, token, w_value, b_value, w_key, b_key, head=3,
                      mxu_dtype=jnp.bfloat16, recompute_kv=None):
    """feature: (N, C, H, W), token: (N, CT, L). Weights (C, CT), biases (C,)."""
    N, C, H, W = feature.shape
    _, CT, L = token.shape
    if C % head != 0:
        raise ValueError(f"C ({C}) must be divisible by head ({head})")
    d = C // head
    HW = H * W
    inv_scale = 1.0 / math.sqrt(C / head)

    if recompute_kv is None:
        # Small batch: recompute K/V per step so the HW-tile axis can be
        # sharded across TensorCores (v7x megacore); large batch keeps the
        # cheaper K/V carry with the batch axis parallel.
        recompute_kv = N < 4

    # Generation-aware VMEM sizing (v7x: 64 MiB/TC, v5e/v6e: 128 MiB).
    try:
        vmem_phys = int(pltpu.get_tpu_info().vmem_capacity_bytes)
    except Exception:
        vmem_phys = 64 * 1024 * 1024  # conservative fallback (v7x per-TC)
    vmem_limit = min(int(0.72 * vmem_phys), 100 * 1024 * 1024)
    vmem_budget = int(0.55 * vmem_phys)

    in_bytes = jnp.dtype(feature.dtype).itemsize
    kv_bytes = jnp.dtype(mxu_dtype).itemsize
    hw_tile = _pick_hw_tile(HW, C, CT + 1, L, d, in_bytes, in_bytes,
                            kv_bytes, vmem_budget)
    n_hw_tiles = pl.cdiv(HW, hw_tile)

    # Free reshape only — no transposes, no extra HBM traffic over `feature`.
    feat_flat = feature.reshape(N, C, HW)                          # (N, C, HW)

    # Fold the softmax scale into the key projection, and the conv biases into
    # an extra contraction column (ones row appended to the tokens).
    w_k = jnp.concatenate([w_key * inv_scale,
                           (b_key * inv_scale)[:, None]], axis=1)  # (C, CT+1)
    w_v = jnp.concatenate([w_value, b_value[:, None]], axis=1)     # (C, CT+1)
    w_kv = jnp.concatenate([w_k, w_v], axis=0).astype(mxu_dtype)   # (2C, CT+1)
    ones = jnp.ones((N, 1, L), dtype=token.dtype)
    tok_aug = jnp.concatenate([token, ones], axis=1).astype(mxu_dtype)  # (N, CT+1, L)

    kernel = _make_projector_kernel(head, d, C,
                                    carry_kv=not recompute_kv,
                                    mxu_dtype=mxu_dtype)

    scratch_shapes = [] if recompute_kv else [pltpu.VMEM((2 * C, L), mxu_dtype)]
    dim_sem = (("parallel", "parallel") if recompute_kv
               else ("parallel", "arbitrary"))  # carry needs sequential HW axis

    out = pl.pallas_call(
        kernel,
        out_shape=jax.ShapeDtypeStruct((N, C, HW), feature.dtype),
        grid_spec=pltpu.PrefetchScalarGridSpec(
            num_scalar_prefetch=0,
            grid=(N, n_hw_tiles),
            in_specs=[
                pl.BlockSpec((None, C, hw_tile), lambda n, t: (n, 0, t)),  # q
                pl.BlockSpec((None, CT + 1, L),  lambda n, t: (n, 0, 0)),  # token(+1)
                pl.BlockSpec((2 * C, CT + 1),    lambda n, t: (0, 0)),     # [Wk|bk;Wv|bv]
            ],
            out_specs=pl.BlockSpec((None, C, hw_tile), lambda n, t: (n, 0, t)),
            scratch_shapes=scratch_shapes,
        ),
        compiler_params=pltpu.CompilerParams(
            dimension_semantics=dim_sem,
            vmem_limit_bytes=vmem_limit,
        ),
    )(feat_flat, tok_aug, w_kv)

    return out.reshape(N, C, H, W)


def _reference_forward(feature, token, w_value, b_value, w_key, b_key, head=3):
    """Pure-JAX reference mirroring the PyTorch module."""
    N, C, H, W = feature.shape
    _, CT, L = token.shape
    h = head
    d = C // h
    proj_v = (jnp.einsum("ck,nkl->ncl", w_value, token) + b_value[None, :, None]
              ).reshape(N, h, d, L)
    proj_k = (jnp.einsum("ck,nkl->ncl", w_key, token) + b_key[None, :, None]
              ).reshape(N, h, d, L)
    proj_q = feature.reshape(N, h, d, H * W).transpose(0, 1, 3, 2)            # (N,h,HW,d)
    coef = jax.nn.softmax(
        jnp.einsum("nhqd,nhdl->nhql", proj_q, proj_k) / math.sqrt(C / h), axis=3)
    proj = jnp.einsum("nhdl,nhql->nhdq", proj_v, coef).reshape(N, C, H, W)
    return feature + proj


if __name__ == "__main__":
    # Small shapes consistent with the module: head=3, so C divisible by 3.
    N, C, H, W = 2, 12, 8, 8
    CT, L = 6, 8
    head = 3

    key = jax.random.PRNGKey(0)
    k1, k2, k3, k4, k5, k6 = jax.random.split(key, 6)
    feature = jax.random.normal(k1, (N, C, H, W), dtype=jnp.float32)
    token = jax.random.normal(k2, (N, CT, L), dtype=jnp.float32)
    # Deterministic synthetic Conv1d(CT, C, 1) parameters.
    w_value = 0.1 * jax.random.normal(k3, (C, CT), dtype=jnp.float32)
    b_value = 0.1 * jax.random.normal(k4, (C,), dtype=jnp.float32)
    w_key = 0.1 * jax.random.normal(k5, (C, CT), dtype=jnp.float32)
    b_key = 0.1 * jax.random.normal(k6, (C,), dtype=jnp.float32)

    ref = _reference_forward(feature, token, w_value, b_value, w_key, b_key, head=head)

    # Default path (small N -> K/V recomputed, both grid axes parallel).
    out = projector_forward(feature, token, w_value, b_value, w_key, b_key, head=head)
    out = jax.block_until_ready(out)
    assert out.shape == (N, C, H, W)
    # Tolerance reflects bf16 MXU operands + approx-reciprocal normalization.
    assert jnp.allclose(out, ref, atol=1e-2, rtol=1e-2)

    # K/V-carry path (large-batch configuration), exercised explicitly.
    out_carry = projector_forward(feature, token, w_value, b_value, w_key, b_key,
                                  head=head, recompute_kv=False)
    out_carry = jax.block_until_ready(out_carry)
    assert out_carry.shape == (N, C, H, W)
    assert jnp.allclose(out_carry, ref, atol=1e-2, rtol=1e-2)

    print("KERNEL_OK")
</pallas_src>

<mosaic_0001>
module attributes {stable_mosaic.version = 11 : i64} {
  func.func @projector_kernel(%arg0: i32, %arg1: i32, %arg2: memref<1x12x64xf32, #tpu.memory_space<vmem>>, %arg3: memref<1x7x8xbf16, #tpu.memory_space<vmem>>, %arg4: memref<24x7xbf16, #tpu.memory_space<vmem>>, %arg5: memref<1x12x64xf32, #tpu.memory_space<vmem>>) attributes {dimension_semantics = [#tpu.dimension_semantics<parallel>, #tpu.dimension_semantics<parallel>], iteration_bounds = array<i64: 2, 1>, scalar_prefetch = 0 : i64, scratch_operands = 0 : i64, tpu.core_type = #tpu.core_type<tc>, window_params = [{transform_indices = @transform_0, window_bounds = array<i64: 1, 12, 64>}, {transform_indices = @transform_1, window_bounds = array<i64: 1, 7, 8>}, {pipeline_mode = #tpu.pipeline_mode<synchronous>, transform_indices = @transform_2, window_bounds = array<i64: 24, 7>}, {transform_indices = @transform_3, window_bounds = array<i64: 1, 12, 64>}]} {
    %c0 = arith.constant 0 : index
    %c0_0 = arith.constant 0 : index
    %0 = vector.load %arg4[%c0, %c0_0] : memref<24x7xbf16, #tpu.memory_space<vmem>>, vector<24x7xbf16>
    %c0_1 = arith.constant 0 : index
    %c0_2 = arith.constant 0 : index
    %c0_3 = arith.constant 0 : index
    %1 = vector.load %arg3[%c0_1, %c0_2, %c0_3] : memref<1x7x8xbf16, #tpu.memory_space<vmem>>, vector<1x7x8xbf16>
    %2 = vector.shape_cast %1 : vector<1x7x8xbf16> to vector<7x8xbf16>
    %cst = arith.constant dense<0.000000e+00> : vector<24x8xf32>
    %3 = tpu.matmul %0, %2, %cst {dimension_numbers = #tpu.dot_dimension_numbers<[1], [0], [0], [1], [0, 0, 1, 1], [], []>} : vector<24x7xbf16>, vector<7x8xbf16>, vector<24x8xf32> -> vector<24x8xf32>
    %4 = arith.truncf %3 : vector<24x8xf32> to vector<24x8xbf16>
    %c0_4 = arith.constant 0 : index
    %c0_5 = arith.constant 0 : index
    %c0_6 = arith.constant 0 : index
    %5 = vector.load %arg2[%c0_4, %c0_5, %c0_6] : memref<1x12x64xf32, #tpu.memory_space<vmem>>, vector<1x12x64xf32>
    %6 = vector.shape_cast %5 : vector<1x12x64xf32> to vector<12x64xf32>
    %7 = arith.truncf %6 : vector<12x64xf32> to vector<12x64xbf16>
    %8 = vector.extract_strided_slice %4 {offsets = [0, 0], sizes = [4, 8], strides = [1, 1]} : vector<24x8xbf16> to vector<4x8xbf16>
    %9 = vector.extract_strided_slice %4 {offsets = [12, 0], sizes = [4, 8], strides = [1, 1]} : vector<24x8xbf16> to vector<4x8xbf16>
    %10 = vector.extract_strided_slice %7 {offsets = [0, 0], sizes = [4, 64], strides = [1, 1]} : vector<12x64xbf16> to vector<4x64xbf16>
    %cst_7 = arith.constant dense<0.000000e+00> : vector<8x64xf32>
    %11 = tpu.matmul %8, %10, %cst_7 {dimension_numbers = #tpu.dot_dimension_numbers<[0], [0], [1], [1], [0, 1, 1, 1], [], []>} : vector<4x8xbf16>, vector<4x64xbf16>, vector<8x64xf32> -> vector<8x64xf32>
    %cst_8 = arith.constant dense<0xFF800000> : vector<64xf32>
    %12 = vector.multi_reduction <maximumf>, %11, %cst_8 [0] : vector<8x64xf32> to vector<64xf32>
    %13 = vector.shape_cast %12 : vector<64xf32> to vector<1x64xf32>
    %14 = vector.broadcast %13 : vector<1x64xf32> to vector<8x64xf32>
    %15 = arith.subf %11, %14 : vector<8x64xf32>
    %16 = math.exp %15 : vector<8x64xf32>
    %cst_9 = arith.constant dense<0.000000e+00> : vector<64xf32>
    %17 = vector.multi_reduction <add>, %16, %cst_9 [0] : vector<8x64xf32> to vector<64xf32>
    %18 = vector.shape_cast %17 : vector<64xf32> to vector<1x64xf32>
    %19 = arith.truncf %16 : vector<8x64xf32> to vector<8x64xbf16>
    %cst_10 = arith.constant dense<0.000000e+00> : vector<4x64xf32>
    %20 = tpu.matmul %9, %19, %cst_10 {dimension_numbers = #tpu.dot_dimension_numbers<[1], [0], [0], [1], [0, 0, 1, 1], [], []>} : vector<4x8xbf16>, vector<8x64xbf16>, vector<4x64xf32> -> vector<4x64xf32>
    %21 = tpu.reciprocal %18 {approx = true} : vector<1x64xf32> -> vector<1x64xf32>
    %22 = vector.broadcast %21 : vector<1x64xf32> to vector<4x64xf32>
    %23 = arith.mulf %20, %22 : vector<4x64xf32>
    %24 = vector.extract_strided_slice %6 {offsets = [0, 0], sizes = [4, 64], strides = [1, 1]} : vector<12x64xf32> to vector<4x64xf32>
    %25 = arith.addf %24, %23 : vector<4x64xf32>
    %c0_11 = arith.constant 0 : index
    %c0_12 = arith.constant 0 : index
    %c0_13 = arith.constant 0 : index
    %26 = vector.load %arg5[%c0_11, %c0_12, %c0_13] : memref<1x12x64xf32, #tpu.memory_space<vmem>>, vector<1x4x64xf32>
    %27 = vector.shape_cast %26 : vector<1x4x64xf32> to vector<4x64xf32>
    %28 = vector.shape_cast %25 : vector<4x64xf32> to vector<1x4x64xf32>
    tpu.vector_store %arg5[%c0_11, %c0_12, %c0_13], %28 {strides = array<i32>} : memref<1x12x64xf32, #tpu.memory_space<vmem>>, vector<1x4x64xf32>,
    %29 = vector.extract_strided_slice %4 {offsets = [4, 0], sizes = [4, 8], strides = [1, 1]} : vector<24x8xbf16> to vector<4x8xbf16>
    %30 = vector.extract_strided_slice %4 {offsets = [16, 0], sizes = [4, 8], strides = [1, 1]} : vector<24x8xbf16> to vector<4x8xbf16>
    %31 = vector.extract_strided_slice %7 {offsets = [4, 0], sizes = [4, 64], strides = [1, 1]} : vector<12x64xbf16> to vector<4x64xbf16>
    %cst_14 = arith.constant dense<0.000000e+00> : vector<8x64xf32>
    %32 = tpu.matmul %29, %31, %cst_14 {dimension_numbers = #tpu.dot_dimension_numbers<[0], [0], [1], [1], [0, 1, 1, 1], [], []>} : vector<4x8xbf16>, vector<4x64xbf16>, vector<8x64xf32> -> vector<8x64xf32>
    %cst_15 = arith.constant dense<0xFF800000> : vector<64xf32>
    %33 = vector.multi_reduction <maximumf>, %32, %cst_15 [0] : vector<8x64xf32> to vector<64xf32>
    %34 = vector.shape_cast %33 : vector<64xf32> to vector<1x64xf32>
    %35 = vector.broadcast %34 : vector<1x64xf32> to vector<8x64xf32>
    %36 = arith.subf %32, %35 : vector<8x64xf32>
    %37 = math.exp %36 : vector<8x64xf32>
    %cst_16 = arith.constant dense<0.000000e+00> : vector<64xf32>
    %38 = vector.multi_reduction <add>, %37, %cst_16 [0] : vector<8x64xf32> to vector<64xf32>
    %39 = vector.shape_cast %38 : vector<64xf32> to vector<1x64xf32>
    %40 = arith.truncf %37 : vector<8x64xf32> to vector<8x64xbf16>
    %cst_17 = arith.constant dense<0.000000e+00> : vector<4x64xf32>
    %41 = tpu.matmul %30, %40, %cst_17 {dimension_numbers = #tpu.dot_dimension_numbers<[1], [0], [0], [1], [0, 0, 1, 1], [], []>} : vector<4x8xbf16>, vector<8x64xbf16>, vector<4x64xf32> -> vector<4x64xf32>
    %42 = tpu.reciprocal %39 {approx = true} : vector<1x64xf32> -> vector<1x64xf32>
    %43 = vector.broadcast %42 : vector<1x64xf32> to vector<4x64xf32>
    %44 = arith.mulf %41, %43 : vector<4x64xf32>
    %45 = vector.extract_strided_slice %6 {offsets = [4, 0], sizes = [4, 64], strides = [1, 1]} : vector<12x64xf32> to vector<4x64xf32>
    %46 = arith.addf %45, %44 : vector<4x64xf32>
    %c0_18 = arith.constant 0 : index
    %c4 = arith.constant 4 : index
    %c0_19 = arith.constant 0 : index
    %47 = vector.load %arg5[%c0_18, %c4, %c0_19] : memref<1x12x64xf32, #tpu.memory_space<vmem>>, vector<1x4x64xf32>
    %48 = vector.shape_cast %47 : vector<1x4x64xf32> to vector<4x64xf32>
    %49 = vector.shape_cast %46 : vector<4x64xf32> to vector<1x4x64xf32>
    tpu.vector_store %arg5[%c0_18, %c4, %c0_19], %49 {strides = array<i32>} : memref<1x12x64xf32, #tpu.memory_space<vmem>>, vector<1x4x64xf32>,
    %50 = vector.extract_strided_slice %4 {offsets = [8, 0], sizes = [4, 8], strides = [1, 1]} : vector<24x8xbf16> to vector<4x8xbf16>
    %51 = vector.extract_strided_slice %4 {offsets = [20, 0], sizes = [4, 8], strides = [1, 1]} : vector<24x8xbf16> to vector<4x8xbf16>
    %52 = vector.extract_strided_slice %7 {offsets = [8, 0], sizes = [4, 64], strides = [1, 1]} : vector<12x64xbf16> to vector<4x64xbf16>
    %cst_20 = arith.constant dense<0.000000e+00> : vector<8x64xf32>
    %53 = tpu.matmul %50, %52, %cst_20 {dimension_numbers = #tpu.dot_dimension_numbers<[0], [0], [1], [1], [0, 1, 1, 1], [], []>} : vector<4x8xbf16>, vector<4x64xbf16>, vector<8x64xf32> -> vector<8x64xf32>
    %cst_21 = arith.constant dense<0xFF800000> : vector<64xf32>
    %54 = vector.multi_reduction <maximumf>, %53, %cst_21 [0] : vector<8x64xf32> to vector<64xf32>
    %55 = vector.shape_cast %54 : vector<64xf32> to vector<1x64xf32>
    %56 = vector.broadcast %55 : vector<1x64xf32> to vector<8x64xf32>
    %57 = arith.subf %53, %56 : vector<8x64xf32>
    %58 = math.exp %57 : vector<8x64xf32>
    %cst_22 = arith.constant dense<0.000000e+00> : vector<64xf32>
    %59 = vector.multi_reduction <add>, %58, %cst_22 [0] : vector<8x64xf32> to vector<64xf32>
    %60 = vector.shape_cast %59 : vector<64xf32> to vector<1x64xf32>
    %61 = arith.truncf %58 : vector<8x64xf32> to vector<8x64xbf16>
    %cst_23 = arith.constant dense<0.000000e+00> : vector<4x64xf32>
    %62 = tpu.matmul %51, %61, %cst_23 {dimension_numbers = #tpu.dot_dimension_numbers<[1], [0], [0], [1], [0, 0, 1, 1], [], []>} : vector<4x8xbf16>, vector<8x64xbf16>, vector<4x64xf32> -> vector<4x64xf32>
    %63 = tpu.reciprocal %60 {approx = true} : vector<1x64xf32> -> vector<1x64xf32>
    %64 = vector.broadcast %63 : vector<1x64xf32> to vector<4x64xf32>
    %65 = arith.mulf %62, %64 : vector<4x64xf32>
    %66 = vector.extract_strided_slice %6 {offsets = [8, 0], sizes = [4, 64], strides = [1, 1]} : vector<12x64xf32> to vector<4x64xf32>
    %67 = arith.addf %66, %65 : vector<4x64xf32>
    %c0_24 = arith.constant 0 : index
    %c8 = arith.constant 8 : index
    %c0_25 = arith.constant 0 : index
    %68 = vector.load %arg5[%c0_24, %c8, %c0_25] : memref<1x12x64xf32, #tpu.memory_space<vmem>>, vector<1x4x64xf32>
    %69 = vector.shape_cast %68 : vector<1x4x64xf32> to vector<4x64xf32>
    %70 = vector.shape_cast %67 : vector<4x64xf32> to vector<1x4x64xf32>
    tpu.vector_store %arg5[%c0_24, %c8, %c0_25], %70 {strides = array<i32>} : memref<1x12x64xf32, #tpu.memory_space<vmem>>, vector<1x4x64xf32>,
    return
  }
  func.func @transform_0(%arg0: i32, %arg1: i32) -> (i32, i32, i32) {
    %c0_i32 = arith.constant 0 : i32
    %c0_i32_0 = arith.constant 0 : i32
    return %arg0, %c0_i32, %arg1 : i32, i32, i32
  }
  func.func @transform_1(%arg0: i32, %arg1: i32) -> (i32, i32, i32) {
    %c0_i32 = arith.constant 0 : i32
    %c0_i32_0 = arith.constant 0 : i32
    %c0_i32_1 = arith.constant 0 : i32
    return %arg0, %c0_i32, %c0_i32_0 : i32, i32, i32
  }
  func.func @transform_2(%arg0: i32, %arg1: i32) -> (i32, i32) {
    %c0_i32 = arith.constant 0 : i32
    %c0_i32_0 = arith.constant 0 : i32
    %c0_i32_1 = arith.constant 0 : i32
    return %c0_i32, %c0_i32_0 : i32, i32
  }
  func.func @transform_3(%arg0: i32, %arg1: i32) -> (i32, i32, i32) {
    %c0_i32 = arith.constant 0 : i32
    %c0_i32_0 = arith.constant 0 : i32
    return %arg0, %c0_i32, %arg1 : i32, i32, i32
  }
}

</mosaic_0001>

<llo_original>
// kernel: tpu_custom_call.1
$region0: #{tpu_custom_call.1}
  #allocation0 [shape = 'u32[]', space=smem, size = 0x4, offset = 0x4, fixed_abs, tag = 'smem constant byte address 0x4 - core index']
  #allocation1 [shape = 'u32[144,128]{1,0:T(1,128)}', space=vmem, size = 0x12000, scoped, tag = 'internal scratch']
  %s0 = inlined_call_operand.vmem [shape: f32[2,12,64], index: 0, kind: input, shape index: {}]
  %s1 = inlined_call_operand.vmem [shape: bf16[2,7,8], index: 1, kind: input, shape index: {}]
  %s2 = inlined_call_operand.vmem [shape: bf16[24,7], index: 2, kind: input, shape index: {}]
  %s3 = inlined_call_operand.vmem [shape: f32[2,12,64], index: 3, kind: output, shape index: {}]
  %s4 = sld [smem:[#allocation0]]
  $region45: #{tpu_custom_call.1} parent=0
    _
  %s6 = ssub.s32 1, %s4
  %s7 = scalar_select 0, %s6, %s4
  loop: start=0, step=1, limit=4
  $region2: #{tpu_custom_call.1} parent=0 // loop_pre_header
    _
  $region3: #{tpu_custom_call.1} parent=0 // loop_header
    %s9 = sphi 0, %s13
    %p10 = scmp.ge.s32.totalorder %s9, 4
    %s16 = sphi 0, %s28
    %s17 = sphi 0, %s24
    %s18 = sphi 0, %s16
    %s19 = sphi 0, %s17
    %s20 = sphi 0, %s18
    %s21 = sphi 0, %s19
    %s33 = sphi 0, %s35
    %s36 = sphi 0, %s33
    %s37 = sphi 0, %s36
    %s53 = sphi 0, %s37
    %s59 = sphi 0, %s61
    %s62 = sphi 0, %s59
    %s63 = sphi 0, %s62
    %s79 = sphi 0, %s63
    %s83 = sphi 0, %s83
    %s85 = sphi 0, %s83
    %s86 = sphi 0, %s85
    %s100 = sphi 0, %s86
    %s108 = sphi 0, %s110
    %s111 = sphi 0, %s108
    %s112 = sphi 0, %s111
    %s128 = sphi 0, %s112
  $region4: #{tpu_custom_call.1} parent=0 // loop_header_branch
    %12 = sbr.rel (%p10) target = $region8
  $region5: #{tpu_custom_call.1} parent=0 // loop_body
    %s14 = ssub.s32 %s9, 1
    %s15 = ssub.s32 %s9, 2
    %s22 = sadd.s32 1, %s17
    %p23 = scmp.ge.s32.totalorder %s22, 1
    %s24 = scalar_select %p23, 0, %s22
    %s25 = sadd.s32 1, %s16
    %s26 = scalar_select %p23, %s25, %s16
    %p27 = scmp.ge.s32.totalorder %s26, 2
    %s28 = scalar_select %p27, 0, %s26
    %s29 = ssub.s32 %s16, %s28
    %s30 = ssub.s32 %s17, %s24
    %s31 = sor.u32 %s29, %s30
    %p32 = scmp.eq.s32.totalorder %s31, 0
    %s34 = sadd.s32 %s33, 1
    %s35 = scalar_select %p32, %s33, %s34
    %p38 = pneg %p32
    %p39 = scmp.eq.s32.totalorder %s9, 1
    %p40 = por %p38, %p39
    %p41 = scmp.ne.s32.totalorder %s33, %s36
    %p42 = scmp.eq.s32.totalorder %s9, 0
    %p43 = por %p41, %p42
    %p44 = scmp.ne.s32.totalorder %s33, %s36
    %p45 = scmp.eq.s32.totalorder %s14, 1
    %p46 = por %p44, %p45
    %p47 = scmp.ne.s32.totalorder %s36, %s37
    %p48 = scmp.eq.s32.totalorder %s14, 0
    %p49 = por %p47, %p48
    %p50 = scmp.ne.s32.totalorder %s36, %s37
    %p51 = scmp.eq.s32.totalorder %s15, 1
    %p52 = por %p50, %p51
    %p54 = scmp.ne.s32.totalorder %s37, %s53
    %p55 = scmp.eq.s32.totalorder %s15, 0
    %p56 = por %p54, %p55
    %s57 = ssub.s32 %s16, %s28
    %p58 = scmp.eq.s32.totalorder %s57, 0
    %s60 = sadd.s32 %s59, 1
    %s61 = scalar_select %p58, %s59, %s60
    %p64 = pneg %p58
    %p65 = scmp.eq.s32.totalorder %s9, 1
    %p66 = por %p64, %p65
    %p67 = scmp.ne.s32.totalorder %s59, %s62
    %p68 = scmp.eq.s32.totalorder %s9, 0
    %p69 = por %p67, %p68
    %p70 = scmp.ne.s32.totalorder %s59, %s62
    %p71 = scmp.eq.s32.totalorder %s14, 1
    %p72 = por %p70, %p71
    %p73 = scmp.ne.s32.totalorder %s62, %s63
    %p74 = scmp.eq.s32.totalorder %s14, 0
    %p75 = por %p73, %p74
    %p76 = scmp.ne.s32.totalorder %s62, %s63
    %p77 = scmp.eq.s32.totalorder %s15, 1
    %p78 = por %p76, %p77
    %p80 = scmp.ne.s32.totalorder %s63, %s79
    %p81 = scmp.eq.s32.totalorder %s15, 0
    %p82 = por %p80, %p81
    %s84 = sadd.s32 %s83, 1
    %p87 = scmp.eq.s32.totalorder %s9, 1
    %p88 = scmp.ne.s32.totalorder %s83, %s85
    %p89 = scmp.eq.s32.totalorder %s9, 0
    %p90 = por %p88, %p89
    %p91 = scmp.ne.s32.totalorder %s83, %s85
    %p92 = scmp.eq.s32.totalorder %s14, 1
    %p93 = por %p91, %p92
    %p94 = scmp.ne.s32.totalorder %s85, %s86
    %p95 = scmp.eq.s32.totalorder %s14, 0
    %p96 = por %p94, %p95
    %p97 = scmp.ne.s32.totalorder %s85, %s86
    %p98 = scmp.eq.s32.totalorder %s15, 1
    %p99 = por %p97, %p98
    %p101 = scmp.ne.s32.totalorder %s86, %s100
    %p102 = scmp.eq.s32.totalorder %s15, 0
    %p103 = por %p101, %p102
    %s104 = ssub.s32 %s16, %s28
    %s105 = ssub.s32 %s17, %s24
    %s106 = sor.u32 %s104, %s105
    %p107 = scmp.eq.s32.totalorder %s106, 0
    %s109 = sadd.s32 %s108, 1
    %s110 = scalar_select %p107, %s108, %s109
    %p113 = pneg %p107
    %p114 = scmp.eq.s32.totalorder %s9, 1
    %p115 = por %p113, %p114
    %p116 = scmp.ne.s32.totalorder %s108, %s111
    %p117 = scmp.eq.s32.totalorder %s9, 0
    %p118 = por %p116, %p117
    %p119 = scmp.ne.s32.totalorder %s108, %s111
    %p120 = scmp.eq.s32.totalorder %s14, 1
    %p121 = por %p119, %p120
    %p122 = scmp.ne.s32.totalorder %s111, %s112
    %p123 = scmp.eq.s32.totalorder %s14, 0
    %p124 = por %p122, %p123
    %p125 = scmp.ne.s32.totalorder %s111, %s112
    %p126 = scmp.eq.s32.totalorder %s15, 1
    %p127 = por %p125, %p126
    %p129 = scmp.ne.s32.totalorder %s112, %s128
    %p130 = scmp.eq.s32.totalorder %s15, 0
    %p131 = por %p129, %p130
    %p132 = scmp.le.s32.totalorder 1, %s9
    %p133 = scmp.lt.s32.totalorder %s9, 3
    %p134 = pnand %p132, %p133
    %p135 = pneg %p134
    // Predicated region
    $region9: #{tpu_custom_call.1} parent=5 // pred_check
      _
    $region10: #{tpu_custom_call.1} parent=5 // pred_check_branch
      %137 = sbr.rel (%p134) target = $region12
    $region11: #{tpu_custom_call.1} parent=5 // pred_region
      %s138 = ssub.s32 %s9, 1
      // Predicated region
      $region13: #{tpu_custom_call.1} parent=11 // pred_check
        %p139 = pneg %p96
      $region14: #{tpu_custom_call.1} parent=11 // pred_check_branch
        %141 = sbr.rel (%p139) target = $region16
      $region15: #{tpu_custom_call.1} parent=11 // pred_region
        _
      $region16: #{tpu_custom_call.1} parent=11 // pred_fallthru
        _
    $region12: #{tpu_custom_call.1} parent=5 // pred_fallthru
      _
    %p142 = scmp.lt.s32.totalorder %s9, 2
    // Predicated region
    $region17: #{tpu_custom_call.1} parent=5 // pred_check
      %p143 = pneg %p142
    $region18: #{tpu_custom_call.1} parent=5 // pred_check_branch
      %145 = sbr.rel (%p143) target = $region20
    $region19: #{tpu_custom_call.1} parent=5 // pred_region
      // Predicated region
      $region21: #{tpu_custom_call.1} parent=19 // pred_check
        %p146 = pneg %p43
      $region22: #{tpu_custom_call.1} parent=19 // pred_check_branch
        %148 = sbr.rel (%p146) target = $region24
      $region23: #{tpu_custom_call.1} parent=19 // pred_region
        %p149 = scmp.lt.s32.totalorder %s16, 1
        %s150 = scalar_select %p149, %s16, 1
        %p151 = scmp.lt.s32.totalorder %s17, 0
        %s152 = scalar_select %p151, %s17, 0
        %s153 = smul.addr %s150, 2
        %s154 = sadd.s32 %s152, %s153
        %s155 = smul.addr %s154, 8
        %s156 = scalar_lea.vmem %s0, %s155
      $region24: #{tpu_custom_call.1} parent=19 // pred_fallthru
        _
      // Predicated region
      $region25: #{tpu_custom_call.1} parent=19 // pred_check
        %p157 = pneg %p69
      $region26: #{tpu_custom_call.1} parent=19 // pred_check_branch
        %159 = sbr.rel (%p157) target = $region28
      $region27: #{tpu_custom_call.1} parent=19 // pred_region
        %p160 = scmp.lt.s32.totalorder %s16, 1
        %s161 = scalar_select %p160, %s16, 1
        %s162 = smul.addr %s161, 4
        %s163 = scalar_lea.vmem %s1, %s162
      $region28: #{tpu_custom_call.1} parent=19 // pred_fallthru
        _
    $region20: #{tpu_custom_call.1} parent=5 // pred_fallthru
      _
    %p164 = scmp.le.s32.totalorder 1, %s9
    %p165 = scmp.lt.s32.totalorder %s9, 3
    %p166 = pnand %p164, %p165
    %p167 = pneg %p166
    // Predicated region
    $region29: #{tpu_custom_call.1} parent=5 // pred_check
      _
    $region30: #{tpu_custom_call.1} parent=5 // pred_check_branch
      %169 = sbr.rel (%p166) target = $region32
    $region31: #{tpu_custom_call.1} parent=5 // pred_region
      %s170 = ssub.s32 %s9, 1
      %p171 = scmp.lt.s32.totalorder %s18, 1
      %s172 = scalar_select %p171, %s18, 1
      %p173 = scmp.lt.s32.totalorder %s19, 0
      %s174 = scalar_select %p173, %s19, 0
      %s175 = smul.addr %s172, 2
      %s176 = sadd.s32 %s174, %s175
      %s177 = smul.addr %s176, 8
      %s178 = scalar_lea.vmem %s0, %s177
      %p179 = pneg %p49
      %p180 = pneg %p46
      %p181 = scmp.lt.s32.totalorder %s18, 1
      %s182 = scalar_select %p181, %s18, 1
      %s183 = smul.addr %s182, 4
      %s184 = scalar_lea.vmem %s1, %s183
      %p185 = pneg %p75
      %p186 = pneg %p72
      %p187 = pneg %p96
      %p188 = pneg %p93
      %p189 = pneg %p124
      %p190 = pneg %p121
      %p191 = scmp.lt.s32.totalorder %s18, 1
      %s192 = scalar_select %p191, %s18, 1
      %p193 = scmp.lt.s32.totalorder %s19, 0
      %s194 = scalar_select %p193, %s19, 0
      %s195 = smul.addr %s192, 2
      %s196 = sadd.s32 %s194, %s195
      %s197 = smul.addr %s196, 8
      %s198 = scalar_lea.vmem %s3, %s197
      %p199 = scmp.lt.s32.totalorder %s18, 1
      %s200 = scalar_select %p199, %s18, 1
      %p201 = scmp.lt.s32.totalorder %s19, 0
      %s202 = scalar_select %p201, %s19, 0
      %s203 = smul.addr %s200, 2
      %s204 = sadd.s32 %s202, %s203
      %s205 = smul.addr %s204, 8
      %s206 = scalar_lea.vmem %s0, %s205
      %p207 = scmp.lt.s32.totalorder %s18, 1
      %s208 = scalar_select %p207, %s18, 1
      %s209 = smul.addr %s208, 4
      %s210 = scalar_lea.vmem %s1, %s209
      %p211 = scmp.lt.s32.totalorder %s18, 1
      %s212 = scalar_select %p211, %s18, 1
      %p213 = scmp.lt.s32.totalorder %s19, 0
      %s214 = scalar_select %p213, %s19, 0
      %s215 = smul.addr %s212, 2
      %s216 = sadd.s32 %s214, %s215
      %s217 = smul.addr %s216, 8
      %s218 = scalar_lea.vmem %s3, %s217
      %v220 = vld [vmem:[%s2] sm:$0xf]
      %v221 = vld [vmem:[%s2 + $0x4] sm:$0xf]
      %v222 = vld [vmem:[%s2 + $0x8] sm:$0xf]
      %v223 = vld [vmem:[%s210] sm:$0xf]
      %v227 = vunpack.c.l.b16 %v220
      %v228 = vunpack.c.l.b16 %v221
      %v229 = vunpack.c.l.b16 %v222
      %v230 = vpack.c.b16 %v228, %v227
      %v231 = vpack.c.b16 %v229, %v229
      %vm232 = vcmask 56320
      %v234 = vsel %vm232, %v230, 0
      %v237 = vsel %vm232, %v231, 0
      %vm239 = vcmask 1042432
      %vm240 = vcmask 1043456
      %v241 = vsel %vm239, 4294967295, 65535
      %v242 = vsel %vm240, %v241, 0
      %v244 = vand.u32 %v223, %v242
      %246 = vmatprep.subr.bf16.mxu0 0
      %247 = vmatpush1.bf16.msra.mxu0 0
      %248 = vmatprep.subr.bf16.mxu0 0
      %249 = vmatpush1.bf16.msra.mxu0 0
      %250 = vmatprep.subr.bf16.mxu0 0
      %251 = vmatpush1.bf16.msra.mxu0 0
      %252 = vmatprep.subr.bf16.mxu0 0
      %253 = vmatpush1.bf16.msra.mxu0 0
      %254 = vmatprep.subr.bf16.mxu0 0
      %255 = vmatpush1.bf16.msra.mxu0 0
      %256 = vmatprep.subr.bf16.mxu0 0
      %257 = vmatpush1.bf16.msra.mxu0 0
      %258 = vmatprep.subr.bf16.mxu0 0
      %259 = vmatpush1.bf16.msra.mxu0 0
      %260 = vmatprep.subr.bf16.mxu0 0
      %261 = vmatpush1.bf16.msra.mxu0 %v244
      %262 = vmatprep.subr.bf16.mxu0 0
      %263 = vmatpush2.bf16.msra.mxu0 0
      %264 = vmatprep.subr.bf16.mxu0 0
      %265 = vmatpush2.bf16.msra.mxu0 0
      %266 = vmatprep.subr.bf16.mxu0 0
      %267 = vmatpush2.bf16.msra.mxu0 0
      %268 = vmatprep.subr.bf16.mxu0 0
      %269 = vmatpush2.bf16.msra.mxu0 0
      %270 = vmatprep.subr.bf16.mxu0 0
      %271 = vmatpush2.bf16.msra.mxu0 0
      %272 = vmatprep.subr.bf16.mxu0 0
      %273 = vmatpush2.bf16.msra.mxu0 0
      %274 = vmatprep.subr.bf16.mxu0 0
      %275 = vmatpush2.bf16.msra.mxu0 0
      %276 = vmatprep.subr.bf16.mxu0 0
      %277 = vmatpush2.bf16.msra.mxu0 0
      %278 = vmatprep.mubr.bf16.mxu0 0
      %279 = vmatmul.mubr.bf16.gmra.mxu0 %v234
      %v280 = vpop.f32.mrf.mxu0
      %v281 = vadd.f32 0.0, %v280
      %v282 = vpop.f32.mrf.mxu0
      %v283 = vpop.f32.mrf.mxu0
      %v284 = vadd.f32 0.0, %v283
      %v285 = vpop.f32.mrf.mxu0
      %286 = vmatprep.mubr.bf16.mxu0 0
      %287 = vmatmul.mubr.bf16.gmra.mxu0 %v237
      %v288 = vpop.f32.mrf.mxu0
      %v289 = vadd.f32 0.0, %v288
      %v290 = vpop.f32.mrf.mxu0
      %v291 = vpop.f32.mrf.mxu0
      %v292 = vpop.f32.mrf.mxu0
      %293 = vdwg.mxu0
      %v294 = vpack.c.bf16 %v284, %v281
      %v295 = vpack.c.bf16 %v289, %v289
      %v296 = vld [vmem:[%s206] sm:$0xff]
      %v297 = vld [vmem:[%s206 + $0x8] sm:$0xf]
      %v298 = vpack.c.bf16 %v297, %v296
      %299 = vxpose.xlu0.c.b16.start [1/8] %v294, 128
      %300 = vxpose.xlu0.c.b16.cont [2/8] 0, 128
      %301 = vxpose.xlu0.c.b16.cont [3/8] 0, 128
      %302 = vxpose.xlu0.c.b16.cont [4/8] 0, 128
      %303 = vxpose.xlu0.c.b16.cont [5/8] 0, 128
      %304 = vxpose.xlu0.c.b16.cont [6/8] 0, 128
      %305 = vxpose.xlu0.c.b16.cont [7/8] 0, 128
      %306 = vxpose.xlu0.c.b16.end [8/8] 0, 128
      %v307 = vpop.trf.xlu0
      %v308 = vpop.trf.xlu0
      %v309 = vpop.trf.xlu0
      %v310 = vpop.trf.xlu0
      %v311 = vpop.trf.xlu0
      %v312 = vpop.trf.xlu0
      %v313 = vpop.trf.xlu0
      %v314 = vpop.trf.xlu0
      %vm315 = vcmask 31744
      %v317 = vsel %vm315, %v307, 0
      %vm319 = vcmask 1041408
      %v321 = vsel %vm319, %v298, 0
      %323 = vmatprep.subr.bf16.mxu0 0
      %324 = vmatpush1.bf16.msra.mxu0 0
      %325 = vmatprep.subr.bf16.mxu0 0
      %326 = vmatpush1.bf16.msra.mxu0 0
      %327 = vmatprep.subr.bf16.mxu0 0
      %328 = vmatpush1.bf16.msra.mxu0 0
      %329 = vmatprep.subr.bf16.mxu0 0
      %330 = vmatpush1.bf16.msra.mxu0 0
      %331 = vmatprep.subr.bf16.mxu0 0
      %332 = vmatpush1.bf16.msra.mxu0 0
      %333 = vmatprep.subr.bf16.mxu0 0
      %334 = vmatpush1.bf16.msra.mxu0 0
      %335 = vmatprep.subr.bf16.mxu0 0
      %336 = vmatpush1.bf16.msra.mxu0 0
      %337 = vmatprep.subr.bf16.mxu0 0
      %338 = vmatpush1.bf16.msra.mxu0 %v321
      %339 = vmatprep.subr.bf16.mxu0 0
      %340 = vmatpush2.bf16.msra.mxu0 0
      %341 = vmatprep.subr.bf16.mxu0 0
      %342 = vmatpush2.bf16.msra.mxu0 0
      %343 = vmatprep.subr.bf16.mxu0 0
      %344 = vmatpush2.bf16.msra.mxu0 0
      %345 = vmatprep.subr.bf16.mxu0 0
      %346 = vmatpush2.bf16.msra.mxu0 0
      %347 = vmatprep.subr.bf16.mxu0 0
      %348 = vmatpush2.bf16.msra.mxu0 0
      %349 = vmatprep.subr.bf16.mxu0 0
      %350 = vmatpush2.bf16.msra.mxu0 0
      %351 = vmatprep.subr.bf16.mxu0 0
      %352 = vmatpush2.bf16.msra.mxu0 0
      %353 = vmatprep.subr.bf16.mxu0 0
      %354 = vmatpush2.bf16.msra.mxu0 0
      %355 = vmatprep.mubr.bf16.mxu0 0
      %356 = vmatmul.mubr.bf16.gmra.mxu0 %v317
      %v357 = vpop.f32.mrf.mxu0
      %v358 = vadd.f32 0.0, %v357
      %v359 = vpop.f32.mrf.mxu0
      %v360 = vpop.f32.mrf.mxu0
      %v361 = vpop.f32.mrf.mxu0
      %362 = vdwg.mxu0
      %vm363 = vcmask 523264
      %v364 = vsel %vm363, %v358, -inf
      %v365 = vrot.slane %v364, 4
      %v366 = vmax.f32 %v364, %v365
      %v367 = vrot.slane %v366, 2
      %v368 = vmax.f32 %v366, %v367
      %v369 = vrot.slane %v368, 1
      %v370 = vmax.f32 %v368, %v369
      %v371 = vsub.f32 %v358, %v370
      %v372 = vmul.f32 %v371, 1.442695
      %v373 = vpow.pop %v372
      %v374 = vsel %vm363, %v373, 0.0
      %v375 = vrot.slane %v374, 4
      %v376 = vadd.f32 %v374, %v375
      %v377 = vrot.slane %v376, 2
      %v378 = vadd.f32 %v376, %v377
      %v379 = vrot.slane %v378, 1
      %v380 = vadd.f32 %v378, %v379
      %v381 = vpack.c.bf16 %v373, %v373
      %v383 = vrot.slane %v294, 6
      %vm384 = vcmask 64512
      %v386 = vsel %vm384, %v383, 0
      %v389 = vsel %vm240, %v381, 0
      %391 = vmatprep.subr.bf16.mxu0 0
      %392 = vmatpush1.bf16.msra.mxu0 0
      %393 = vmatprep.subr.bf16.mxu0 0
      %394 = vmatpush1.bf16.msra.mxu0 0
      %395 = vmatprep.subr.bf16.mxu0 0
      %396 = vmatpush1.bf16.msra.mxu0 0
      %397 = vmatprep.subr.bf16.mxu0 0
      %398 = vmatpush1.bf16.msra.mxu0 0
      %399 = vmatprep.subr.bf16.mxu0 0
      %400 = vmatpush1.bf16.msra.mxu0 0
      %401 = vmatprep.subr.bf16.mxu0 0
      %402 = vmatpush1.bf16.msra.mxu0 0
      %403 = vmatprep.subr.bf16.mxu0 0
      %404 = vmatpush1.bf16.msra.mxu0 0
      %405 = vmatprep.subr.bf16.mxu0 0
      %406 = vmatpush1.bf16.msra.mxu0 %v389
      %407 = vmatprep.subr.bf16.mxu0 0
      %408 = vmatpush2.bf16.msra.mxu0 0
      %409 = vmatprep.subr.bf16.mxu0 0
      %410 = vmatpush2.bf16.msra.mxu0 0
      %411 = vmatprep.subr.bf16.mxu0 0
      %412 = vmatpush2.bf16.msra.mxu0 0
      %413 = vmatprep.subr.bf16.mxu0 0
      %414 = vmatpush2.bf16.msra.mxu0 0
      %415 = vmatprep.subr.bf16.mxu0 0
      %416 = vmatpush2.bf16.msra.mxu0 0
      %417 = vmatprep.subr.bf16.mxu0 0
      %418 = vmatpush2.bf16.msra.mxu0 0
      %419 = vmatprep.subr.bf16.mxu0 0
      %420 = vmatpush2.bf16.msra.mxu0 0
      %421 = vmatprep.subr.bf16.mxu0 0
      %422 = vmatpush2.bf16.msra.mxu0 0
      %423 = vmatprep.mubr.bf16.mxu0 0
      %424 = vmatmul.mubr.bf16.gmra.mxu0 %v386
      %v425 = vpop.f32.mrf.mxu0
      %v426 = vadd.f32 0.0, %v425
      %v427 = vpop.f32.mrf.mxu0
      %v428 = vpop.f32.mrf.mxu0
      %v429 = vpop.f32.mrf.mxu0
      %430 = vdwg.mxu0
      %v431 = vrcp.pop %v380
      %v432 = vmul.f32 %v426, %v431
      %v433 = vadd.f32 %v296, %v432
      %vm434 = vcmask 519168
      %435 = vst.msk [vmem:[%s218] sm:$0xf] %vm434, %v433
      %v436 = vrot.slane %v294, 2
      %438 = vxpose.xlu0.c.b16.start [1/8] %v436, 128
      %439 = vxpose.xlu0.c.b16.cont [2/8] 0, 128
      %440 = vxpose.xlu0.c.b16.cont [3/8] 0, 128
      %441 = vxpose.xlu0.c.b16.cont [4/8] 0, 128
      %442 = vxpose.xlu0.c.b16.cont [5/8] 0, 128
      %443 = vxpose.xlu0.c.b16.cont [6/8] 0, 128
      %444 = vxpose.xlu0.c.b16.cont [7/8] 0, 128
      %445 = vxpose.xlu0.c.b16.end [8/8] 0, 128
      %v446 = vpop.trf.xlu0
      %v447 = vpop.trf.xlu0
      %v448 = vpop.trf.xlu0
      %v449 = vpop.trf.xlu0
      %v450 = vpop.trf.xlu0
      %v451 = vpop.trf.xlu0
      %v452 = vpop.trf.xlu0
      %v453 = vpop.trf.xlu0
      %v455 = vrot.slane %v298, 2
      %v457 = vsel %vm315, %v446, 0
      %v460 = vsel %vm319, %v455, 0
      %462 = vmatprep.subr.bf16.mxu0 0
      %463 = vmatpush1.bf16.msra.mxu0 0
      %464 = vmatprep.subr.bf16.mxu0 0
      %465 = vmatpush1.bf16.msra.mxu0 0
      %466 = vmatprep.subr.bf16.mxu0 0
      %467 = vmatpush1.bf16.msra.mxu0 0
      %468 = vmatprep.subr.bf16.mxu0 0
      %469 = vmatpush1.bf16.msra.mxu0 0
      %470 = vmatprep.subr.bf16.mxu0 0
      %471 = vmatpush1.bf16.msra.mxu0 0
      %472 = vmatprep.subr.bf16.mxu0 0
      %473 = vmatpush1.bf16.msra.mxu0 0
      %474 = vmatprep.subr.bf16.mxu0 0
      %475 = vmatpush1.bf16.msra.mxu0 0
      %476 = vmatprep.subr.bf16.mxu0 0
      %477 = vmatpush1.bf16.msra.mxu0 %v460
      %478 = vmatprep.subr.bf16.mxu0 0
      %479 = vmatpush2.bf16.msra.mxu0 0
      %480 = vmatprep.subr.bf16.mxu0 0
      %481 = vmatpush2.bf16.msra.mxu0 0
      %482 = vmatprep.subr.bf16.mxu0 0
      %483 = vmatpush2.bf16.msra.mxu0 0
      %484 = vmatprep.subr.bf16.mxu0 0
      %485 = vmatpush2.bf16.msra.mxu0 0
      %486 = vmatprep.subr.bf16.mxu0 0
      %487 = vmatpush2.bf16.msra.mxu0 0
      %488 = vmatprep.subr.bf16.mxu0 0
      %489 = vmatpush2.bf16.msra.mxu0 0
      %490 = vmatprep.subr.bf16.mxu0 0
      %491 = vmatpush2.bf16.msra.mxu0 0
      %492 = vmatprep.subr.bf16.mxu0 0
      %493 = vmatpush2.bf16.msra.mxu0 0
      %494 = vmatprep.mubr.bf16.mxu0 0
      %495 = vmatmul.mubr.bf16.gmra.mxu0 %v457
      %v496 = vpop.f32.mrf.mxu0
      %v497 = vadd.f32 0.0, %v496
      %v498 = vpop.f32.mrf.mxu0
      %v499 = vpop.f32.mrf.mxu0
      %v500 = vpop.f32.mrf.mxu0
      %501 = vdwg.mxu0
      %v502 = vsel %vm363, %v497, -inf
      %v503 = vrot.slane %v502, 4
      %v504 = vmax.f32 %v502, %v503
      %v505 = vrot.slane %v504, 2
      %v506 = vmax.f32 %v504, %v505
      %v507 = vrot.slane %v506, 1
      %v508 = vmax.f32 %v506, %v507
      %v509 = vsub.f32 %v497, %v508
      %v510 = vmul.f32 %v509, 1.442695
      %v511 = vpow.pop %v510
      %v512 = vsel %vm363, %v511, 0.0
      %v513 = vrot.slane %v512, 4
      %v514 = vadd.f32 %v512, %v513
      %v515 = vrot.slane %v514, 2
      %v516 = vadd.f32 %v514, %v515
      %v517 = vrot.slane %v516, 1
      %v518 = vadd.f32 %v516, %v517
      %v519 = vpack.c.bf16 %v511, %v511
      %v521 = vsel %vm384, %v295, 0
      %v524 = vsel %vm240, %v519, 0
      %526 = vmatprep.subr.bf16.mxu0 0
      %527 = vmatpush1.bf16.msra.mxu0 0
      %528 = vmatprep.subr.bf16.mxu0 0
      %529 = vmatpush1.bf16.msra.mxu0 0
      %530 = vmatprep.subr.bf16.mxu0 0
      %531 = vmatpush1.bf16.msra.mxu0 0
      %532 = vmatprep.subr.bf16.mxu0 0
      %533 = vmatpush1.bf16.msra.mxu0 0
      %534 = vmatprep.subr.bf16.mxu0 0
      %535 = vmatpush1.bf16.msra.mxu0 0
      %536 = vmatprep.subr.bf16.mxu0 0
      %537 = vmatpush1.bf16.msra.mxu0 0
      %538 = vmatprep.subr.bf16.mxu0 0
      %539 = vmatpush1.bf16.msra.mxu0 0
      %540 = vmatprep.subr.bf16.mxu0 0
      %541 = vmatpush1.bf16.msra.mxu0 %v524
      %542 = vmatprep.subr.bf16.mxu0 0
      %543 = vmatpush2.bf16.msra.mxu0 0
      %544 = vmatprep.subr.bf16.mxu0 0
      %545 = vmatpush2.bf16.msra.mxu0 0
      %546 = vmatprep.subr.bf16.mxu0 0
      %547 = vmatpush2.bf16.msra.mxu0 0
      %548 = vmatprep.subr.bf16.mxu0 0
      %549 = vmatpush2.bf16.msra.mxu0 0
      %550 = vmatprep.subr.bf16.mxu0 0
      %551 = vmatpush2.bf16.msra.mxu0 0
      %552 = vmatprep.subr.bf16.mxu0 0
      %553 = vmatpush2.bf16.msra.mxu0 0
      %554 = vmatprep.subr.bf16.mxu0 0
      %555 = vmatpush2.bf16.msra.mxu0 0
      %556 = vmatprep.subr.bf16.mxu0 0
      %557 = vmatpush2.bf16.msra.mxu0 0
      %558 = vmatprep.mubr.bf16.mxu0 0
      %559 = vmatmul.mubr.bf16.gmra.mxu0 %v521
      %v560 = vpop.f32.mrf.mxu0
      %v561 = vadd.f32 0.0, %v560
      %v562 = vpop.f32.mrf.mxu0
      %v563 = vpop.f32.mrf.mxu0
      %v564 = vpop.f32.mrf.mxu0
      %565 = vdwg.mxu0
      %v566 = vrcp.pop %v518
      %v567 = vmul.f32 %v561, %v566
      %v569 = vrot.slane %v567, 4
      %v571 = vadd.f32 %v296, %v569
      %vm572 = vcmask 523268
      %573 = vst.msk [vmem:[%s218] sm:$0xf0] %vm572, %v571
      %v574 = vrot.slane %v294, 4
      %576 = vxpose.xlu0.c.b16.start [1/8] %v574, 128
      %577 = vxpose.xlu0.c.b16.cont [2/8] 0, 128
      %578 = vxpose.xlu0.c.b16.cont [3/8] 0, 128
      %579 = vxpose.xlu0.c.b16.cont [4/8] 0, 128
      %580 = vxpose.xlu0.c.b16.cont [5/8] 0, 128
      %581 = vxpose.xlu0.c.b16.cont [6/8] 0, 128
      %582 = vxpose.xlu0.c.b16.cont [7/8] 0, 128
      %583 = vxpose.xlu0.c.b16.end [8/8] 0, 128
      %v584 = vpop.trf.xlu0
      %v585 = vpop.trf.xlu0
      %v586 = vpop.trf.xlu0
      %v587 = vpop.trf.xlu0
      %v588 = vpop.trf.xlu0
      %v589 = vpop.trf.xlu0
      %v590 = vpop.trf.xlu0
      %v591 = vpop.trf.xlu0
      %v592 = vrot.slane %v298, 4
      %v594 = vsel %vm315, %v584, 0
      %v597 = vsel %vm319, %v592, 0
      %599 = vmatprep.subr.bf16.mxu0 0
      %600 = vmatpush1.bf16.msra.mxu0 0
      %601 = vmatprep.subr.bf16.mxu0 0
      %602 = vmatpush1.bf16.msra.mxu0 0
      %603 = vmatprep.subr.bf16.mxu0 0
      %604 = vmatpush1.bf16.msra.mxu0 0
      %605 = vmatprep.subr.bf16.mxu0 0
      %606 = vmatpush1.bf16.msra.mxu0 0
      %607 = vmatprep.subr.bf16.mxu0 0
      %608 = vmatpush1.bf16.msra.mxu0 0
      %609 = vmatprep.subr.bf16.mxu0 0
      %610 = vmatpush1.bf16.msra.mxu0 0
      %611 = vmatprep.subr.bf16.mxu0 0
      %612 = vmatpush1.bf16.msra.mxu0 0
      %613 = vmatprep.subr.bf16.mxu0 0
      %614 = vmatpush1.bf16.msra.mxu0 %v597
      %615 = vmatprep.subr.bf16.mxu0 0
      %616 = vmatpush2.bf16.msra.mxu0 0
      %617 = vmatprep.subr.bf16.mxu0 0
      %618 = vmatpush2.bf16.msra.mxu0 0
      %619 = vmatprep.subr.bf16.mxu0 0
      %620 = vmatpush2.bf16.msra.mxu0 0
      %621 = vmatprep.subr.bf16.mxu0 0
      %622 = vmatpush2.bf16.msra.mxu0 0
      %623 = vmatprep.subr.bf16.mxu0 0
      %624 = vmatpush2.bf16.msra.mxu0 0
      %625 = vmatprep.subr.bf16.mxu0 0
      %626 = vmatpush2.bf16.msra.mxu0 0
      %627 = vmatprep.subr.bf16.mxu0 0
      %628 = vmatpush2.bf16.msra.mxu0 0
      %629 = vmatprep.subr.bf16.mxu0 0
      %630 = vmatpush2.bf16.msra.mxu0 0
      %631 = vmatprep.mubr.bf16.mxu0 0
      %632 = vmatmul.mubr.bf16.gmra.mxu0 %v594
      %v633 = vpop.f32.mrf.mxu0
      %v634 = vadd.f32 0.0, %v633
      %v635 = vpop.f32.mrf.mxu0
      %v636 = vpop.f32.mrf.mxu0
      %v637 = vpop.f32.mrf.mxu0
      %638 = vdwg.mxu0
      %v639 = vsel %vm363, %v634, -inf
      %v640 = vrot.slane %v639, 4
      %v641 = vmax.f32 %v639, %v640
      %v642 = vrot.slane %v641, 2
      %v643 = vmax.f32 %v641, %v642
      %v644 = vrot.slane %v643, 1
      %v645 = vmax.f32 %v643, %v644
      %v646 = vsub.f32 %v634, %v645
      %v647 = vmul.f32 %v646, 1.442695
      %v648 = vpow.pop %v647
      %v649 = vsel %vm363, %v648, 0.0
      %v650 = vrot.slane %v649, 4
      %v651 = vadd.f32 %v649, %v650
      %v652 = vrot.slane %v651, 2
      %v653 = vadd.f32 %v651, %v652
      %v654 = vrot.slane %v653, 1
      %v655 = vadd.f32 %v653, %v654
      %v656 = vpack.c.bf16 %v648, %v648
      %v658 = vrot.slane %v295, 2
      %v660 = vsel %vm384, %v658, 0
      %v663 = vsel %vm240, %v656, 0
      %665 = vmatprep.subr.bf16.mxu0 0
      %666 = vmatpush1.bf16.msra.mxu0 0
      %667 = vmatprep.subr.bf16.mxu0 0
      %668 = vmatpush1.bf16.msra.mxu0 0
      %669 = vmatprep.subr.bf16.mxu0 0
      %670 = vmatpush1.bf16.msra.mxu0 0
      %671 = vmatprep.subr.bf16.mxu0 0
      %672 = vmatpush1.bf16.msra.mxu0 0
      %673 = vmatprep.subr.bf16.mxu0 0
      %674 = vmatpush1.bf16.msra.mxu0 0
      %675 = vmatprep.subr.bf16.mxu0 0
      %676 = vmatpush1.bf16.msra.mxu0 0
      %677 = vmatprep.subr.bf16.mxu0 0
      %678 = vmatpush1.bf16.msra.mxu0 0
      %679 = vmatprep.subr.bf16.mxu0 0
      %680 = vmatpush1.bf16.msra.mxu0 %v663
      %681 = vmatprep.subr.bf16.mxu0 0
      %682 = vmatpush2.bf16.msra.mxu0 0
      %683 = vmatprep.subr.bf16.mxu0 0
      %684 = vmatpush2.bf16.msra.mxu0 0
      %685 = vmatprep.subr.bf16.mxu0 0
      %686 = vmatpush2.bf16.msra.mxu0 0
      %687 = vmatprep.subr.bf16.mxu0 0
      %688 = vmatpush2.bf16.msra.mxu0 0
      %689 = vmatprep.subr.bf16.mxu0 0
      %690 = vmatpush2.bf16.msra.mxu0 0
      %691 = vmatprep.subr.bf16.mxu0 0
      %692 = vmatpush2.bf16.msra.mxu0 0
      %693 = vmatprep.subr.bf16.mxu0 0
      %694 = vmatpush2.bf16.msra.mxu0 0
      %695 = vmatprep.subr.bf16.mxu0 0
      %696 = vmatpush2.bf16.msra.mxu0 0
      %697 = vmatprep.mubr.bf16.mxu0 0
      %698 = vmatmul.mubr.bf16.gmra.mxu0 %v660
      %v699 = vpop.f32.mrf.mxu0
      %v700 = vadd.f32 0.0, %v699
      %v701 = vpop.f32.mrf.mxu0
      %v702 = vpop.f32.mrf.mxu0
      %v703 = vpop.f32.mrf.mxu0
      %704 = vdwg.mxu0
      %v705 = vrcp.pop %v655
      %v706 = vmul.f32 %v700, %v705
      %v707 = vadd.f32 %v297, %v706
      %708 = vst.msk [vmem:[%s218 + $0x8] sm:$0xf] %vm434, %v707
      %p709 = scmp.lt.s32.totalorder %s18, 1
      %s710 = scalar_select %p709, %s18, 1
      %p711 = scmp.lt.s32.totalorder %s19, 0
      %s712 = scalar_select %p711, %s19, 0
      %s713 = smul.addr %s710, 2
      %s714 = sadd.s32 %s712, %s713
      %s715 = smul.addr %s714, 8
      %s716 = scalar_lea.vmem %s3, %s715
      // Predicated region
      $region33: #{tpu_custom_call.1} parent=31 // pred_check
        %p717 = pneg %p121
      $region34: #{tpu_custom_call.1} parent=31 // pred_check_branch
        %719 = sbr.rel (%p717) target = $region36
      $region35: #{tpu_custom_call.1} parent=31 // pred_region
        _
      $region36: #{tpu_custom_call.1} parent=31 // pred_fallthru
        _
    $region32: #{tpu_custom_call.1} parent=5 // pred_fallthru
      _
    %p720 = scmp.le.s32.totalorder 2, %s9
    // Predicated region
    $region37: #{tpu_custom_call.1} parent=5 // pred_check
      %p721 = pneg %p720
    $region38: #{tpu_custom_call.1} parent=5 // pred_check_branch
      %723 = sbr.rel (%p721) target = $region40
    $region39: #{tpu_custom_call.1} parent=5 // pred_region
      %s724 = ssub.s32 %s9, 2
      // Predicated region
      $region41: #{tpu_custom_call.1} parent=39 // pred_check
        %p725 = pneg %p127
      $region42: #{tpu_custom_call.1} parent=39 // pred_check_branch
        %727 = sbr.rel (%p725) target = $region44
      $region43: #{tpu_custom_call.1} parent=39 // pred_region
        %p728 = scmp.lt.s32.totalorder %s20, 1
        %s729 = scalar_select %p728, %s20, 1
        %p730 = scmp.lt.s32.totalorder %s21, 0
        %s731 = scalar_select %p730, %s21, 0
        %s732 = smul.addr %s729, 2
        %s733 = sadd.s32 %s731, %s732
        %s734 = smul.addr %s733, 8
        %s735 = scalar_lea.vmem %s3, %s734
      $region44: #{tpu_custom_call.1} parent=39 // pred_fallthru
        _
    $region40: #{tpu_custom_call.1} parent=5 // pred_fallthru
      _
  $region6: #{tpu_custom_call.1} parent=0 // loop_footer
    %s13 = sadd.s32 1, %s9
  $region7: #{tpu_custom_call.1} parent=0 // loop_footer_branch
    %8 = sbr.rel target = $region3
  $region8: #{tpu_custom_call.1} parent=0 // loop_exit
    _

</llo_original>
